<compile_context>
chip_gen: v7x
topology: tpu7x:2x2x1
jax: 0.10.0
libtpu: 0.0.40
codegen_flags: <defaults>
</compile_context>

<pallas_src>
import functools

import jax
import jax.numpy as jnp
from jax.experimental import pallas as pl
from jax.experimental.pallas import tpu as pltpu

LEAK = 0.2
LANE = 128
SUBLANE = 8


def _lrelu(x):
    return jnp.where(x > 0, x, LEAK * x)


def generator_kernel(x_ref, w1_ref, b1_ref, w2_ref, b2_ref, w3_ref, b3_ref, out_ref):
    # fc1 + leaky_relu (dropout = identity in eval mode)
    h = jnp.dot(x_ref[...], w1_ref[...], preferred_element_type=jnp.float32) + b1_ref[...]
    h = _lrelu(h)
    # fc2 + leaky_relu
    h = jnp.dot(h, w2_ref[...], preferred_element_type=jnp.float32) + b2_ref[...]
    h = _lrelu(h)
    # fc3 + leaky_relu
    h = jnp.dot(h, w3_ref[...], preferred_element_type=jnp.float32) + b3_ref[...]
    h = _lrelu(h)
    # fc4 + tanh is computed in the reference module but its result is discarded
    # (the module returns the post-fc3 activation), so it is omitted here.
    out_ref[...] = h.astype(out_ref.dtype)


def _round_up(n, m):
    return ((n + m - 1) // m) * m


def _pad_to(a, shape):
    if tuple(a.shape) == tuple(shape):
        return a
    pads = [(0, t - s) for s, t in zip(a.shape, shape)]
    return jnp.pad(a, pads)


@functools.partial(jax.jit, static_argnames=("batch_tile",))
def generator_forward(x, params, *, batch_tile=256):
    """x: (B, input_size) f32.  Returns (B, hidden_dim*4) f32."""
    w1, b1, w2, b2, w3, b3 = params
    B, D0 = x.shape
    D1, D2, D3 = w1.shape[1], w2.shape[1], w3.shape[1]

    # Lane-pad all feature dims to multiples of 128 (exact: padded weight rows/cols
    # and bias entries are zero, and lrelu(0) == 0, so padding never leaks).
    D0p, D1p, D2p, D3p = (_round_up(d, LANE) for d in (D0, D1, D2, D3))

    # Batch tile: multiple of 8 sublanes, capped at `batch_tile` rows.
    TB = min(_round_up(batch_tile, SUBLANE), _round_up(B, SUBLANE))
    Bp = _round_up(B, TB)

    xp = _pad_to(x, (Bp, D0p))
    w1p, b1p = _pad_to(w1, (D0p, D1p)), _pad_to(b1, (1, D1p))
    w2p, b2p = _pad_to(w2, (D1p, D2p)), _pad_to(b2, (1, D2p))
    w3p, b3p = _pad_to(w3, (D2p, D3p)), _pad_to(b3, (1, D3p))

    grid = (Bp // TB,)

    # Weights/biases: constant block index -> stay VMEM-resident across batch tiles.
    def resident(arr):
        return pl.BlockSpec(arr.shape, lambda i: (0, 0))

    out = pl.pallas_call(
        generator_kernel,
        out_shape=jax.ShapeDtypeStruct((Bp, D3p), jnp.float32),
        grid=grid,
        in_specs=[
            pl.BlockSpec((TB, D0p), lambda i: (i, 0)),
            resident(w1p), resident(b1p),
            resident(w2p), resident(b2p),
            resident(w3p), resident(b3p),
        ],
        out_specs=pl.BlockSpec((TB, D3p), lambda i: (i, 0)),
        compiler_params=pltpu.CompilerParams(dimension_semantics=("parallel",)),
    )(xp, w1p, b1p, w2p, b2p, w3p, b3p)

    return out[:B, :D3]


def init_params(key, input_size, hidden_dim, output_size):
    """Deterministic small-scale init matching nn.Linear shapes (stored transposed)."""
    ks = jax.random.split(key, 8)
    scale = 0.1

    def lin(kw, kb, fan_in, fan_out):
        w = scale * jax.random.normal(kw, (fan_in, fan_out), dtype=jnp.float32)
        b = scale * jax.random.normal(kb, (1, fan_out), dtype=jnp.float32)
        return w, b

    w1, b1 = lin(ks[0], ks[1], input_size, hidden_dim)
    w2, b2 = lin(ks[2], ks[3], hidden_dim, hidden_dim * 2)
    w3, b3 = lin(ks[4], ks[5], hidden_dim * 2, hidden_dim * 4)
    # fc4 (hidden_dim*4 -> output_size) exists in the module but its output is
    # discarded by forward(); parameters are not needed for the returned value.
    return (w1, b1, w2, b2, w3, b3)


def reference_forward(x, params):
    """Plain-JAX reference for correctness check."""
    w1, b1, w2, b2, w3, b3 = params
    h = _lrelu(x @ w1 + b1)
    h = _lrelu(h @ w2 + b2)
    h = _lrelu(h @ w3 + b3)
    return h


if __name__ == "__main__":
    key = jax.random.PRNGKey(0)
    k_x, k_p, k_x2 = jax.random.split(key, 3)

    # Small shapes consistent with the module: z-vector -> hidden stack.
    batch = 8
    input_size = 16      # latent z dim
    hidden_dim = 32      # fc widths: 32, 64, 128
    output_size = 784    # fc4 target (unused by the returned value)

    params = init_params(k_p, input_size, hidden_dim, output_size)

    # Single-tile case.
    x = jax.random.normal(k_x, (batch, input_size), dtype=jnp.float32)
    out = jax.block_until_ready(generator_forward(x, params))
    ref = reference_forward(x, params)
    assert out.shape == (batch, hidden_dim * 4), out.shape
    assert jnp.allclose(out, ref, atol=1e-5, rtol=1e-5), "mismatch vs JAX reference (B=8)"

    # Multi-tile case: forces grid > 1 to exercise batch tiling / resident weights.
    x2 = jax.random.normal(k_x2, (64, input_size), dtype=jnp.float32)
    out2 = jax.block_until_ready(generator_forward(x2, params, batch_tile=16))
    ref2 = reference_forward(x2, params)
    assert out2.shape == (64, hidden_dim * 4), out2.shape
    assert jnp.allclose(out2, ref2, atol=1e-5, rtol=1e-5), "mismatch vs JAX reference (B=64)"

    print("KERNEL_OK")
</pallas_src>

<mosaic_0001>
module attributes {stable_mosaic.version = 11 : i64} {
  func.func @generator_kernel(%arg0: i32, %arg1: memref<8x128xf32, #tpu.memory_space<vmem>>, %arg2: memref<128x128xf32, #tpu.memory_space<vmem>>, %arg3: memref<1x128xf32, #tpu.memory_space<vmem>>, %arg4: memref<128x128xf32, #tpu.memory_space<vmem>>, %arg5: memref<1x128xf32, #tpu.memory_space<vmem>>, %arg6: memref<128x128xf32, #tpu.memory_space<vmem>>, %arg7: memref<1x128xf32, #tpu.memory_space<vmem>>, %arg8: memref<8x128xf32, #tpu.memory_space<vmem>>) attributes {dimension_semantics = [#tpu.dimension_semantics<parallel>], iteration_bounds = array<i64: 1>, scalar_prefetch = 0 : i64, scratch_operands = 0 : i64, tpu.core_type = #tpu.core_type<tc>, window_params = [{transform_indices = @transform_0, window_bounds = array<i64: 8, 128>}, {pipeline_mode = #tpu.pipeline_mode<synchronous>, transform_indices = @transform_1, window_bounds = array<i64: 128, 128>}, {pipeline_mode = #tpu.pipeline_mode<synchronous>, transform_indices = @transform_2, window_bounds = array<i64: 1, 128>}, {pipeline_mode = #tpu.pipeline_mode<synchronous>, transform_indices = @transform_3, window_bounds = array<i64: 128, 128>}, {pipeline_mode = #tpu.pipeline_mode<synchronous>, transform_indices = @transform_4, window_bounds = array<i64: 1, 128>}, {pipeline_mode = #tpu.pipeline_mode<synchronous>, transform_indices = @transform_5, window_bounds = array<i64: 128, 128>}, {pipeline_mode = #tpu.pipeline_mode<synchronous>, transform_indices = @transform_6, window_bounds = array<i64: 1, 128>}, {transform_indices = @transform_7, window_bounds = array<i64: 8, 128>}]} {
    %c0 = arith.constant 0 : index
    %c0_0 = arith.constant 0 : index
    %0 = vector.load %arg1[%c0, %c0_0] : memref<8x128xf32, #tpu.memory_space<vmem>>, vector<8x128xf32>
    %c0_1 = arith.constant 0 : index
    %c0_2 = arith.constant 0 : index
    %1 = vector.load %arg2[%c0_1, %c0_2] : memref<128x128xf32, #tpu.memory_space<vmem>>, vector<128x128xf32>
    %cst = arith.constant dense<0.000000e+00> : vector<8x128xf32>
    %2 = tpu.matmul %0, %1, %cst {dimension_numbers = #tpu.dot_dimension_numbers<[1], [0], [0], [1], [0, 0, 1, 1], [], []>} : vector<8x128xf32>, vector<128x128xf32>, vector<8x128xf32> -> vector<8x128xf32>
    %c0_3 = arith.constant 0 : index
    %c0_4 = arith.constant 0 : index
    %3 = vector.load %arg3[%c0_3, %c0_4] : memref<1x128xf32, #tpu.memory_space<vmem>>, vector<1x128xf32>
    %4 = vector.broadcast %3 : vector<1x128xf32> to vector<8x128xf32>
    %5 = arith.addf %2, %4 : vector<8x128xf32>
    %cst_5 = arith.constant 0.000000e+00 : f32
    %6 = vector.broadcast %cst_5 : f32 to vector<8x128xf32>
    %7 = arith.cmpf ogt, %5, %6 : vector<8x128xf32>
    %cst_6 = arith.constant 2.000000e-01 : f32
    %8 = vector.broadcast %cst_6 : f32 to vector<8x128xf32>
    %9 = arith.mulf %8, %5 : vector<8x128xf32>
    %10 = arith.select %7, %5, %9 : vector<8x128xi1>, vector<8x128xf32>
    %c0_7 = arith.constant 0 : index
    %c0_8 = arith.constant 0 : index
    %11 = vector.load %arg4[%c0_7, %c0_8] : memref<128x128xf32, #tpu.memory_space<vmem>>, vector<128x128xf32>
    %cst_9 = arith.constant dense<0.000000e+00> : vector<8x128xf32>
    %12 = tpu.matmul %10, %11, %cst_9 {dimension_numbers = #tpu.dot_dimension_numbers<[1], [0], [0], [1], [0, 0, 1, 1], [], []>} : vector<8x128xf32>, vector<128x128xf32>, vector<8x128xf32> -> vector<8x128xf32>
    %c0_10 = arith.constant 0 : index
    %c0_11 = arith.constant 0 : index
    %13 = vector.load %arg5[%c0_10, %c0_11] : memref<1x128xf32, #tpu.memory_space<vmem>>, vector<1x128xf32>
    %14 = vector.broadcast %13 : vector<1x128xf32> to vector<8x128xf32>
    %15 = arith.addf %12, %14 : vector<8x128xf32>
    %cst_12 = arith.constant 0.000000e+00 : f32
    %16 = vector.broadcast %cst_12 : f32 to vector<8x128xf32>
    %17 = arith.cmpf ogt, %15, %16 : vector<8x128xf32>
    %cst_13 = arith.constant 2.000000e-01 : f32
    %18 = vector.broadcast %cst_13 : f32 to vector<8x128xf32>
    %19 = arith.mulf %18, %15 : vector<8x128xf32>
    %20 = arith.select %17, %15, %19 : vector<8x128xi1>, vector<8x128xf32>
    %c0_14 = arith.constant 0 : index
    %c0_15 = arith.constant 0 : index
    %21 = vector.load %arg6[%c0_14, %c0_15] : memref<128x128xf32, #tpu.memory_space<vmem>>, vector<128x128xf32>
    %cst_16 = arith.constant dense<0.000000e+00> : vector<8x128xf32>
    %22 = tpu.matmul %20, %21, %cst_16 {dimension_numbers = #tpu.dot_dimension_numbers<[1], [0], [0], [1], [0, 0, 1, 1], [], []>} : vector<8x128xf32>, vector<128x128xf32>, vector<8x128xf32> -> vector<8x128xf32>
    %c0_17 = arith.constant 0 : index
    %c0_18 = arith.constant 0 : index
    %23 = vector.load %arg7[%c0_17, %c0_18] : memref<1x128xf32, #tpu.memory_space<vmem>>, vector<1x128xf32>
    %24 = vector.broadcast %23 : vector<1x128xf32> to vector<8x128xf32>
    %25 = arith.addf %22, %24 : vector<8x128xf32>
    %cst_19 = arith.constant 0.000000e+00 : f32
    %26 = vector.broadcast %cst_19 : f32 to vector<8x128xf32>
    %27 = arith.cmpf ogt, %25, %26 : vector<8x128xf32>
    %cst_20 = arith.constant 2.000000e-01 : f32
    %28 = vector.broadcast %cst_20 : f32 to vector<8x128xf32>
    %29 = arith.mulf %28, %25 : vector<8x128xf32>
    %30 = arith.select %27, %25, %29 : vector<8x128xi1>, vector<8x128xf32>
    %c0_21 = arith.constant 0 : index
    %c0_22 = arith.constant 0 : index
    %31 = vector.load %arg8[%c0_21, %c0_22] : memref<8x128xf32, #tpu.memory_space<vmem>>, vector<8x128xf32>
    tpu.vector_store %arg8[%c0_21, %c0_22], %30 {strides = array<i32>} : memref<8x128xf32, #tpu.memory_space<vmem>>, vector<8x128xf32>,
    return
  }
  func.func @transform_0(%arg0: i32) -> (i32, i32) {
    %c0_i32 = arith.constant 0 : i32
    %c0_i32_0 = arith.constant 0 : i32
    return %arg0, %c0_i32 : i32, i32
  }
  func.func @transform_1(%arg0: i32) -> (i32, i32) {
    %c0_i32 = arith.constant 0 : i32
    %c0_i32_0 = arith.constant 0 : i32
    %c0_i32_1 = arith.constant 0 : i32
    return %c0_i32, %c0_i32_0 : i32, i32
  }
  func.func @transform_2(%arg0: i32) -> (i32, i32) {
    %c0_i32 = arith.constant 0 : i32
    %c0_i32_0 = arith.constant 0 : i32
    %c0_i32_1 = arith.constant 0 : i32
    return %c0_i32, %c0_i32_0 : i32, i32
  }
  func.func @transform_3(%arg0: i32) -> (i32, i32) {
    %c0_i32 = arith.constant 0 : i32
    %c0_i32_0 = arith.constant 0 : i32
    %c0_i32_1 = arith.constant 0 : i32
    return %c0_i32, %c0_i32_0 : i32, i32
  }
  func.func @transform_4(%arg0: i32) -> (i32, i32) {
    %c0_i32 = arith.constant 0 : i32
    %c0_i32_0 = arith.constant 0 : i32
    %c0_i32_1 = arith.constant 0 : i32
    return %c0_i32, %c0_i32_0 : i32, i32
  }
  func.func @transform_5(%arg0: i32) -> (i32, i32) {
    %c0_i32 = arith.constant 0 : i32
    %c0_i32_0 = arith.constant 0 : i32
    %c0_i32_1 = arith.constant 0 : i32
    return %c0_i32, %c0_i32_0 : i32, i32
  }
  func.func @transform_6(%arg0: i32) -> (i32, i32) {
    %c0_i32 = arith.constant 0 : i32
    %c0_i32_0 = arith.constant 0 : i32
    %c0_i32_1 = arith.constant 0 : i32
    return %c0_i32, %c0_i32_0 : i32, i32
  }
  func.func @transform_7(%arg0: i32) -> (i32, i32) {
    %c0_i32 = arith.constant 0 : i32
    %c0_i32_0 = arith.constant 0 : i32
    return %arg0, %c0_i32 : i32, i32
  }
}

</mosaic_0001>

<llo_original>
// kernel: generator_forward.1
$region0: #{generator_forward.1}
  #allocation0 [shape = 'u32[]', space=smem, size = 0x4, offset = 0x4, fixed_abs, tag = 'smem constant byte address 0x4 - core index']
  #allocation1 [shape = 'u32[144,128]{1,0:T(1,128)}', space=vmem, size = 0x12000, scoped, tag = 'internal scratch']
  %s0 = inlined_call_operand.vmem [shape: f32[8,128], index: 0, kind: input, shape index: {}]
  %s1 = inlined_call_operand.vmem [shape: f32[128,128], index: 1, kind: input, shape index: {}]
  %s2 = inlined_call_operand.vmem [shape: f32[1,128], index: 2, kind: input, shape index: {}]
  %s3 = inlined_call_operand.vmem [shape: f32[128,128], index: 3, kind: input, shape index: {}]
  %s4 = inlined_call_operand.vmem [shape: f32[1,128], index: 4, kind: input, shape index: {}]
  %s5 = inlined_call_operand.vmem [shape: f32[128,128], index: 5, kind: input, shape index: {}]
  %s6 = inlined_call_operand.vmem [shape: f32[1,128], index: 6, kind: input, shape index: {}]
  %s7 = inlined_call_operand.hbm [shape: f32[8,128], index: 7, kind: output, shape index: {}]
  %s8 = sld [smem:[#allocation0]]
  $region38: #{generator_forward.1} parent=0
    _
  %s10 = ssub.s32 1, %s8
  %s11 = scalar_select 0, %s10, %s8
  $region1: #{generator_forward.1} parent=0
    #allocation2 [shape = 'u8[4096]{0}', space=vmem, size = 0x1000, scoped, tag = 'output window, operand 0, single buffered']
    #allocation3 [shape = 's32[1]{0}', space=sflag, size = 0x4, scoped, tag = 'scoped memory for generator_forward.1']
    %12 = vsyncpa [#allocation3], 0
    // Predicated region
    $region2: #{generator_forward.1} parent=1 // pred_check
      _
    $region3: #{generator_forward.1} parent=1 // pred_check_branch
      %14 = sbr.rel (0) target = $region5
    $region4: #{generator_forward.1} parent=1 // pred_region
      _
    $region5: #{generator_forward.1} parent=1 // pred_fallthru
      _
    // Predicated region
    $region6: #{generator_forward.1} parent=1 // pred_check
      _
    $region7: #{generator_forward.1} parent=1 // pred_check_branch
      %16 = sbr.rel (0) target = $region9
    $region8: #{generator_forward.1} parent=1 // pred_region
      _
    $region9: #{generator_forward.1} parent=1 // pred_fallthru
      _
    // Predicated region
    $region10: #{generator_forward.1} parent=1 // pred_check
      _
    $region11: #{generator_forward.1} parent=1 // pred_check_branch
      %18 = sbr.rel (0) target = $region13
    $region12: #{generator_forward.1} parent=1 // pred_region
      _
    $region13: #{generator_forward.1} parent=1 // pred_fallthru
      _
    // Predicated region
    $region14: #{generator_forward.1} parent=1 // pred_check
      _
    $region15: #{generator_forward.1} parent=1 // pred_check_branch
      %20 = sbr.rel (0) target = $region17
    $region16: #{generator_forward.1} parent=1 // pred_region
      _
    $region17: #{generator_forward.1} parent=1 // pred_fallthru
      _
    // Predicated region
    $region18: #{generator_forward.1} parent=1 // pred_check
      _
    $region19: #{generator_forward.1} parent=1 // pred_check_branch
      %22 = sbr.rel (0) target = $region21
    $region20: #{generator_forward.1} parent=1 // pred_region
      _
    $region21: #{generator_forward.1} parent=1 // pred_fallthru
      _
    // Predicated region
    $region22: #{generator_forward.1} parent=1 // pred_check
      _
    $region23: #{generator_forward.1} parent=1 // pred_check_branch
      %24 = sbr.rel (0) target = $region25
    $region24: #{generator_forward.1} parent=1 // pred_region
      _
    $region25: #{generator_forward.1} parent=1 // pred_fallthru
      _
    // Predicated region
    $region26: #{generator_forward.1} parent=1 // pred_check
      _
    $region27: #{generator_forward.1} parent=1 // pred_check_branch
      %26 = sbr.rel (0) target = $region29
    $region28: #{generator_forward.1} parent=1 // pred_region
      _
    $region29: #{generator_forward.1} parent=1 // pred_fallthru
      _
    %v27 = vld [vmem:[%s0] sm:$0xff]
    %v28 = vld [vmem:[%s1] sm:$0xff]
    %v29 = vld [vmem:[%s1 + $0x8] sm:$0xff]
    %v30 = vld [vmem:[%s1 + $0x10] sm:$0xff]
    %v31 = vld [vmem:[%s1 + $0x18] sm:$0xff]
    %v32 = vld [vmem:[%s1 + $0x20] sm:$0xff]
    %v33 = vld [vmem:[%s1 + $0x28] sm:$0xff]
    %v34 = vld [vmem:[%s1 + $0x30] sm:$0xff]
    %v35 = vld [vmem:[%s1 + $0x38] sm:$0xff]
    %v36 = vld [vmem:[%s1 + $0x40] sm:$0xff]
    %v37 = vld [vmem:[%s1 + $0x48] sm:$0xff]
    %v38 = vld [vmem:[%s1 + $0x50] sm:$0xff]
    %v39 = vld [vmem:[%s1 + $0x58] sm:$0xff]
    %v40 = vld [vmem:[%s1 + $0x60] sm:$0xff]
    %v41 = vld [vmem:[%s1 + $0x68] sm:$0xff]
    %v42 = vld [vmem:[%s1 + $0x70] sm:$0xff]
    %v43 = vld [vmem:[%s1 + $0x78] sm:$0xff]
    %v44 = vld [vmem:[%s2] sm:$0x1]
    %v46 = vlaneseq
    %v47 = vshrl.u32 %v46, 7
    %v48 = vsub.s32 0, %v47
    %v49 = vrot.slane %v44, %v48
    %51 = vmatprep.subr.mxu0 0.0
    %52 = vmatpush1.msra.mxu0 %v28
    %53 = vmatprep.subr.mxu0 0.0
    %54 = vmatpush1.msra.mxu0 %v29
    %55 = vmatprep.subr.mxu0 0.0
    %56 = vmatpush1.msra.mxu0 %v30
    %57 = vmatprep.subr.mxu0 0.0
    %58 = vmatpush1.msra.mxu0 %v31
    %59 = vmatprep.subr.mxu0 0.0
    %60 = vmatpush1.msra.mxu0 %v32
    %61 = vmatprep.subr.mxu0 0.0
    %62 = vmatpush1.msra.mxu0 %v33
    %63 = vmatprep.subr.mxu0 0.0
    %64 = vmatpush1.msra.mxu0 %v34
    %65 = vmatprep.subr.mxu0 0.0
    %66 = vmatpush1.msra.mxu0 %v35
    %67 = vmatprep.subr.mxu0 0.0
    %68 = vmatpush1.msra.mxu0 %v36
    %69 = vmatprep.subr.mxu0 0.0
    %70 = vmatpush1.msra.mxu0 %v37
    %71 = vmatprep.subr.mxu0 0.0
    %72 = vmatpush1.msra.mxu0 %v38
    %73 = vmatprep.subr.mxu0 0.0
    %74 = vmatpush1.msra.mxu0 %v39
    %75 = vmatprep.subr.mxu0 0.0
    %76 = vmatpush1.msra.mxu0 %v40
    %77 = vmatprep.subr.mxu0 0.0
    %78 = vmatpush1.msra.mxu0 %v41
    %79 = vmatprep.subr.mxu0 0.0
    %80 = vmatpush1.msra.mxu0 %v42
    %81 = vmatprep.subr.mxu0 0.0
    %82 = vmatpush1.msra.mxu0 %v43
    %83 = vmatprep.subr.mxu0 0.0
    %84 = vmatpush1.msra.mxu0 0.0
    %85 = vmatprep.subr.mxu0 0.0
    %86 = vmatpush1.msra.mxu0 0.0
    %87 = vmatprep.subr.mxu0 0.0
    %88 = vmatpush1.msra.mxu0 0.0
    %89 = vmatprep.subr.mxu0 0.0
    %90 = vmatpush1.msra.mxu0 0.0
    %91 = vmatprep.subr.mxu0 0.0
    %92 = vmatpush1.msra.mxu0 0.0
    %93 = vmatprep.subr.mxu0 0.0
    %94 = vmatpush1.msra.mxu0 0.0
    %95 = vmatprep.subr.mxu0 0.0
    %96 = vmatpush1.msra.mxu0 0.0
    %97 = vmatprep.subr.mxu0 0.0
    %98 = vmatpush1.msra.mxu0 0.0
    %99 = vmatprep.subr.mxu0 0.0
    %100 = vmatpush1.msra.mxu0 0.0
    %101 = vmatprep.subr.mxu0 0.0
    %102 = vmatpush1.msra.mxu0 0.0
    %103 = vmatprep.subr.mxu0 0.0
    %104 = vmatpush1.msra.mxu0 0.0
    %105 = vmatprep.subr.mxu0 0.0
    %106 = vmatpush1.msra.mxu0 0.0
    %107 = vmatprep.subr.mxu0 0.0
    %108 = vmatpush1.msra.mxu0 0.0
    %109 = vmatprep.subr.mxu0 0.0
    %110 = vmatpush1.msra.mxu0 0.0
    %111 = vmatprep.subr.mxu0 0.0
    %112 = vmatpush1.msra.mxu0 0.0
    %113 = vmatprep.subr.mxu0 0.0
    %114 = vmatpush1.msra.mxu0 0.0
    %115 = vmatprep.mubr.f32.mxu0 0.0
    %116 = vmatmul.mubr.f32.gmra.mrb[0].mxu0 %v27
    %v117 = vpop.f32.mrb[0].mxu0
    %v118 = vadd.f32 %v49, %v117
    %v119 = vpop.f32.mrb[0].mxu0
    %120 = vdwg.mxu0
    %vm121 = vcmp.gt.f32.partialorder %v118, 0.0
    %v122 = vmul.f32 %v118, 0.2
    %v123 = vsel %vm121, %v118, %v122
    %v124 = vld [vmem:[%s3] sm:$0xff]
    %v125 = vld [vmem:[%s3 + $0x8] sm:$0xff]
    %v126 = vld [vmem:[%s3 + $0x10] sm:$0xff]
    %v127 = vld [vmem:[%s3 + $0x18] sm:$0xff]
    %v128 = vld [vmem:[%s3 + $0x20] sm:$0xff]
    %v129 = vld [vmem:[%s3 + $0x28] sm:$0xff]
    %v130 = vld [vmem:[%s3 + $0x30] sm:$0xff]
    %v131 = vld [vmem:[%s3 + $0x38] sm:$0xff]
    %v132 = vld [vmem:[%s3 + $0x40] sm:$0xff]
    %v133 = vld [vmem:[%s3 + $0x48] sm:$0xff]
    %v134 = vld [vmem:[%s3 + $0x50] sm:$0xff]
    %v135 = vld [vmem:[%s3 + $0x58] sm:$0xff]
    %v136 = vld [vmem:[%s3 + $0x60] sm:$0xff]
    %v137 = vld [vmem:[%s3 + $0x68] sm:$0xff]
    %v138 = vld [vmem:[%s3 + $0x70] sm:$0xff]
    %v139 = vld [vmem:[%s3 + $0x78] sm:$0xff]
    %v140 = vld [vmem:[%s4] sm:$0x1]
    %v142 = vlaneseq
    %v143 = vshrl.u32 %v142, 7
    %v144 = vsub.s32 0, %v143
    %v145 = vrot.slane %v140, %v144
    %147 = vmatprep.subr.mxu0 0.0
    %148 = vmatpush1.msra.mxu0 %v124
    %149 = vmatprep.subr.mxu0 0.0
    %150 = vmatpush1.msra.mxu0 %v125
    %151 = vmatprep.subr.mxu0 0.0
    %152 = vmatpush1.msra.mxu0 %v126
    %153 = vmatprep.subr.mxu0 0.0
    %154 = vmatpush1.msra.mxu0 %v127
    %155 = vmatprep.subr.mxu0 0.0
    %156 = vmatpush1.msra.mxu0 %v128
    %157 = vmatprep.subr.mxu0 0.0
    %158 = vmatpush1.msra.mxu0 %v129
    %159 = vmatprep.subr.mxu0 0.0
    %160 = vmatpush1.msra.mxu0 %v130
    %161 = vmatprep.subr.mxu0 0.0
    %162 = vmatpush1.msra.mxu0 %v131
    %163 = vmatprep.subr.mxu0 0.0
    %164 = vmatpush1.msra.mxu0 %v132
    %165 = vmatprep.subr.mxu0 0.0
    %166 = vmatpush1.msra.mxu0 %v133
    %167 = vmatprep.subr.mxu0 0.0
    %168 = vmatpush1.msra.mxu0 %v134
    %169 = vmatprep.subr.mxu0 0.0
    %170 = vmatpush1.msra.mxu0 %v135
    %171 = vmatprep.subr.mxu0 0.0
    %172 = vmatpush1.msra.mxu0 %v136
    %173 = vmatprep.subr.mxu0 0.0
    %174 = vmatpush1.msra.mxu0 %v137
    %175 = vmatprep.subr.mxu0 0.0
    %176 = vmatpush1.msra.mxu0 %v138
    %177 = vmatprep.subr.mxu0 0.0
    %178 = vmatpush1.msra.mxu0 %v139
    %179 = vmatprep.subr.mxu0 0.0
    %180 = vmatpush1.msra.mxu0 0.0
    %181 = vmatprep.subr.mxu0 0.0
    %182 = vmatpush1.msra.mxu0 0.0
    %183 = vmatprep.subr.mxu0 0.0
    %184 = vmatpush1.msra.mxu0 0.0
    %185 = vmatprep.subr.mxu0 0.0
    %186 = vmatpush1.msra.mxu0 0.0
    %187 = vmatprep.subr.mxu0 0.0
    %188 = vmatpush1.msra.mxu0 0.0
    %189 = vmatprep.subr.mxu0 0.0
    %190 = vmatpush1.msra.mxu0 0.0
    %191 = vmatprep.subr.mxu0 0.0
    %192 = vmatpush1.msra.mxu0 0.0
    %193 = vmatprep.subr.mxu0 0.0
    %194 = vmatpush1.msra.mxu0 0.0
    %195 = vmatprep.subr.mxu0 0.0
    %196 = vmatpush1.msra.mxu0 0.0
    %197 = vmatprep.subr.mxu0 0.0
    %198 = vmatpush1.msra.mxu0 0.0
    %199 = vmatprep.subr.mxu0 0.0
    %200 = vmatpush1.msra.mxu0 0.0
    %201 = vmatprep.subr.mxu0 0.0
    %202 = vmatpush1.msra.mxu0 0.0
    %203 = vmatprep.subr.mxu0 0.0
    %204 = vmatpush1.msra.mxu0 0.0
    %205 = vmatprep.subr.mxu0 0.0
    %206 = vmatpush1.msra.mxu0 0.0
    %207 = vmatprep.subr.mxu0 0.0
    %208 = vmatpush1.msra.mxu0 0.0
    %209 = vmatprep.subr.mxu0 0.0
    %210 = vmatpush1.msra.mxu0 0.0
    %211 = vmatprep.mubr.f32.mxu0 0.0
    %212 = vmatmul.mubr.f32.gmra.mrb[0].mxu0 %v123
    %v213 = vpop.f32.mrb[0].mxu0
    %v214 = vadd.f32 %v145, %v213
    %v215 = vpop.f32.mrb[0].mxu0
    %216 = vdwg.mxu0
    %vm217 = vcmp.gt.f32.partialorder %v214, 0.0
    %v218 = vmul.f32 %v214, 0.2
    %v219 = vsel %vm217, %v214, %v218
    %v220 = vld [vmem:[%s5] sm:$0xff]
    %v221 = vld [vmem:[%s5 + $0x8] sm:$0xff]
    %v222 = vld [vmem:[%s5 + $0x10] sm:$0xff]
    %v223 = vld [vmem:[%s5 + $0x18] sm:$0xff]
    %v224 = vld [vmem:[%s5 + $0x20] sm:$0xff]
    %v225 = vld [vmem:[%s5 + $0x28] sm:$0xff]
    %v226 = vld [vmem:[%s5 + $0x30] sm:$0xff]
    %v227 = vld [vmem:[%s5 + $0x38] sm:$0xff]
    %v228 = vld [vmem:[%s5 + $0x40] sm:$0xff]
    %v229 = vld [vmem:[%s5 + $0x48] sm:$0xff]
    %v230 = vld [vmem:[%s5 + $0x50] sm:$0xff]
    %v231 = vld [vmem:[%s5 + $0x58] sm:$0xff]
    %v232 = vld [vmem:[%s5 + $0x60] sm:$0xff]
    %v233 = vld [vmem:[%s5 + $0x68] sm:$0xff]
    %v234 = vld [vmem:[%s5 + $0x70] sm:$0xff]
    %v235 = vld [vmem:[%s5 + $0x78] sm:$0xff]
    %v236 = vld [vmem:[%s6] sm:$0x1]
    %v238 = vlaneseq
    %v239 = vshrl.u32 %v238, 7
    %v240 = vsub.s32 0, %v239
    %v241 = vrot.slane %v236, %v240
    %243 = vmatprep.subr.mxu0 0.0
    %244 = vmatpush1.msra.mxu0 %v220
    %245 = vmatprep.subr.mxu0 0.0
    %246 = vmatpush1.msra.mxu0 %v221
    %247 = vmatprep.subr.mxu0 0.0
    %248 = vmatpush1.msra.mxu0 %v222
    %249 = vmatprep.subr.mxu0 0.0
    %250 = vmatpush1.msra.mxu0 %v223
    %251 = vmatprep.subr.mxu0 0.0
    %252 = vmatpush1.msra.mxu0 %v224
    %253 = vmatprep.subr.mxu0 0.0
    %254 = vmatpush1.msra.mxu0 %v225
    %255 = vmatprep.subr.mxu0 0.0
    %256 = vmatpush1.msra.mxu0 %v226
    %257 = vmatprep.subr.mxu0 0.0
    %258 = vmatpush1.msra.mxu0 %v227
    %259 = vmatprep.subr.mxu0 0.0
    %260 = vmatpush1.msra.mxu0 %v228
    %261 = vmatprep.subr.mxu0 0.0
    %262 = vmatpush1.msra.mxu0 %v229
    %263 = vmatprep.subr.mxu0 0.0
    %264 = vmatpush1.msra.mxu0 %v230
    %265 = vmatprep.subr.mxu0 0.0
    %266 = vmatpush1.msra.mxu0 %v231
    %267 = vmatprep.subr.mxu0 0.0
    %268 = vmatpush1.msra.mxu0 %v232
    %269 = vmatprep.subr.mxu0 0.0
    %270 = vmatpush1.msra.mxu0 %v233
    %271 = vmatprep.subr.mxu0 0.0
    %272 = vmatpush1.msra.mxu0 %v234
    %273 = vmatprep.subr.mxu0 0.0
    %274 = vmatpush1.msra.mxu0 %v235
    %275 = vmatprep.subr.mxu0 0.0
    %276 = vmatpush1.msra.mxu0 0.0
    %277 = vmatprep.subr.mxu0 0.0
    %278 = vmatpush1.msra.mxu0 0.0
    %279 = vmatprep.subr.mxu0 0.0
    %280 = vmatpush1.msra.mxu0 0.0
    %281 = vmatprep.subr.mxu0 0.0
    %282 = vmatpush1.msra.mxu0 0.0
    %283 = vmatprep.subr.mxu0 0.0
    %284 = vmatpush1.msra.mxu0 0.0
    %285 = vmatprep.subr.mxu0 0.0
    %286 = vmatpush1.msra.mxu0 0.0
    %287 = vmatprep.subr.mxu0 0.0
    %288 = vmatpush1.msra.mxu0 0.0
    %289 = vmatprep.subr.mxu0 0.0
    %290 = vmatpush1.msra.mxu0 0.0
    %291 = vmatprep.subr.mxu0 0.0
    %292 = vmatpush1.msra.mxu0 0.0
    %293 = vmatprep.subr.mxu0 0.0
    %294 = vmatpush1.msra.mxu0 0.0
    %295 = vmatprep.subr.mxu0 0.0
    %296 = vmatpush1.msra.mxu0 0.0
    %297 = vmatprep.subr.mxu0 0.0
    %298 = vmatpush1.msra.mxu0 0.0
    %299 = vmatprep.subr.mxu0 0.0
    %300 = vmatpush1.msra.mxu0 0.0
    %301 = vmatprep.subr.mxu0 0.0
    %302 = vmatpush1.msra.mxu0 0.0
    %303 = vmatprep.subr.mxu0 0.0
    %304 = vmatpush1.msra.mxu0 0.0
    %305 = vmatprep.subr.mxu0 0.0
    %306 = vmatpush1.msra.mxu0 0.0
    %307 = vmatprep.mubr.f32.mxu0 0.0
    %308 = vmatmul.mubr.f32.gmra.mrb[0].mxu0 %v219
    %v309 = vpop.f32.mrb[0].mxu0
    %v310 = vadd.f32 %v241, %v309
    %v311 = vpop.f32.mrb[0].mxu0
    %312 = vdwg.mxu0
    %vm313 = vcmp.gt.f32.partialorder %v310, 0.0
    %v314 = vmul.f32 %v310, 0.2
    %v315 = vsel %vm313, %v310, %v314
    %316 = vst [vmem:[#allocation2] sm:$0xff] %v315
    // Predicated region
    $region30: #{generator_forward.1} parent=1 // pred_check
      _
    $region31: #{generator_forward.1} parent=1 // pred_check_branch
      %318 = sbr.rel (0) target = $region33
    $region32: #{generator_forward.1} parent=1 // pred_region
      %s320 = ssub.s32 128, 128
      %321 = vsyncadd [#allocation3], %s320
      %s323 = sshll.u32 [#allocation2], 4
      %s324 = int_to_ptr.vmem [resolvable:$true] %s323
      %326 = dma.vmem_to_hbm [thread:$0]  %s324, 128, %s7, [#allocation3]
    $region33: #{generator_forward.1} parent=1 // pred_fallthru
      _
    // Predicated region
    $region34: #{generator_forward.1} parent=1 // pred_check
      _
    $region35: #{generator_forward.1} parent=1 // pred_check_branch
      %328 = sbr.rel (0) target = $region37
    $region36: #{generator_forward.1} parent=1 // pred_region
      %329 = dma.done [#allocation3], 128
    $region37: #{generator_forward.1} parent=1 // pred_fallthru
      _
    %330 = vsyncpa [#allocation3], 1

</llo_original>
